<compile_context>
chip_gen: v7x
topology: tpu7x:2x2x1
jax: 0.10.0
libtpu: 0.0.40
codegen_flags: <defaults>
</compile_context>

<pallas_src>
import functools
import random
import warnings

import numpy as np
import jax
import jax.numpy as jnp
from jax.experimental import pallas as pl
from jax.experimental.pallas import tpu as pltpu


# ----------------------------------------------------------------------------
# Pallas kernel: all loss math on tiny [8, n_lane] samples-on-lanes tiles
# ----------------------------------------------------------------------------
def _smooth_l1(d):
    ad = jnp.abs(d)
    return jnp.where(ad < 1.0, 0.5 * d * d, ad - 0.5)


def _ctpn_loss_kernel(scales_ref, meta_ref, pred_ref, out_ref):
    pred = pred_ref[...]        # [8, n_lane]
    meta = meta_ref[...]        # [8, n_lane]

    # pred rows: 0=cls logit0, 1=cls logit1, 2=v pred0, 3=v pred1, 4=o pred
    l0 = pred[0:1, :]
    l1 = pred[1:2, :]
    p0 = pred[2:3, :]
    p1 = pred[3:4, :]
    po = pred[4:5, :]

    # meta rows: 0=cls label, 1=cls mask, 2=v t0, 3=v t1, 4=v mask,
    #            5=o t0, 6=o mask
    lab = meta[0:1, :]
    cmk = meta[1:2, :]
    vt0 = meta[2:3, :]
    vt1 = meta[3:4, :]
    vmk = meta[4:5, :]
    ot0 = meta[5:6, :]
    omk = meta[6:7, :]

    # ---- classification: 2-logit CrossEntropy == softplus(l_other - l_tgt) --
    d = jnp.where(lab > 0.5, l0 - l1, l1 - l0)
    ce = jnp.maximum(d, 0.0) + jnp.log(1.0 + jnp.exp(-jnp.abs(d)))
    cls_loss = jnp.sum(ce * cmk, axis=(0, 1), keepdims=True) * scales_ref[0]

    # ---- vertical regression: mean SmoothL1 over 2 coords --------------------
    per_v = 0.5 * (_smooth_l1(p0 - vt0) + _smooth_l1(p1 - vt1)) * vmk
    v_loss = jnp.sum(per_v, axis=(0, 1), keepdims=True) * scales_ref[1]

    # ---- side refinement: SmoothL1 over 1 coord ------------------------------
    so = _smooth_l1(po - ot0) * omk
    o_loss = jnp.sum(so, axis=(0, 1), keepdims=True) * scales_ref[2]

    total = cls_loss + scales_ref[3] * v_loss + scales_ref[4] * o_loss

    # ---- single lane-contiguous store of the four scalars --------------------
    lane = jax.lax.broadcasted_iota(jnp.int32, (1, 4), 1)
    packed = jnp.zeros((1, 4), jnp.float32)
    packed = jnp.where(lane == 0, total, packed)
    packed = jnp.where(lane == 1, cls_loss, packed)
    packed = jnp.where(lane == 2, v_loss, packed)
    packed = jnp.where(lane == 3, o_loss, packed)
    out_ref[...] = packed


# ----------------------------------------------------------------------------
# Cached pallas_call builder (keyed only on static shapes -> compiled once)
# ----------------------------------------------------------------------------
@functools.lru_cache(maxsize=None)
def _build_ctpn_loss_fn(c2, kk, H, W, n_lane):
    smem = pl.BlockSpec(memory_space=pltpu.MemorySpace.SMEM)
    vmem = pl.BlockSpec(memory_space=pltpu.MemorySpace.VMEM)

    call = pl.pallas_call(
        _ctpn_loss_kernel,
        out_shape=jax.ShapeDtypeStruct((1, 4), jnp.float32),
        in_specs=[smem, vmem, vmem],
        out_specs=vmem,
    )

    def fn(idx, scales, meta, score, vert, side):
        n = n_lane
        # Flat NCHW gather of only the sampled logits / coordinates: the
        # anchor channel is already folded into the host-computed flat index,
        # so no full-map transpose or HW-proportional DMA ever happens.
        score_flat = score[0].astype(jnp.float32).reshape(-1)
        vert_flat = vert[0].astype(jnp.float32).reshape(-1)
        side_flat = side[0].astype(jnp.float32).reshape(-1)

        cls_l0 = jnp.take(score_flat, idx[0 * n:1 * n])
        cls_l1 = jnp.take(score_flat, idx[1 * n:2 * n])
        v_p0 = jnp.take(vert_flat, idx[2 * n:3 * n])
        v_p1 = jnp.take(vert_flat, idx[3 * n:4 * n])
        o_p = jnp.take(side_flat, idx[4 * n:5 * n])

        z = jnp.zeros((n,), jnp.float32)
        pred = jnp.stack([cls_l0, cls_l1, v_p0, v_p1, o_p, z, z, z], axis=0)
        return call(scales, meta, pred)

    return jax.jit(fn)


# ----------------------------------------------------------------------------
# Host-side module (sampling over Python lists, packing, dispatch)
# ----------------------------------------------------------------------------
def _round_lanes(n):
    return max(128, ((n + 127) // 128) * 128)


class CTPNLossPallas:
    def __init__(self, Ns, Nv, No, ratio, lambda1=1.0, lambda2=1.0,
                 sample_seed=None):
        self.Ns, self.Nv, self.No = Ns, Nv, No
        self.ratio = ratio
        self.lambda1, self.lambda2 = float(lambda1), float(lambda2)
        self._n_lane = _round_lanes(max(Ns, Nv, No))
        # PyTorch resamples each forward; a seed is only for reproducible tests.
        self._rng = random.Random(sample_seed) if sample_seed is not None else random
        self.last_sample = None

    def _sample(self, positive, negative, vertical_reg, side_refinement_reg):
        positive_num = min(int(self.Ns * self.ratio), len(positive))
        negative_num = min(self.Ns - positive_num, len(negative))
        pos_b = self._rng.sample(positive, positive_num)
        neg_b = self._rng.sample(negative, negative_num)
        nv = min(len(vertical_reg), self.Nv)
        v_b = self._rng.sample(vertical_reg, nv) if nv else []
        no = min(len(side_refinement_reg), self.No)
        o_b = self._rng.sample(side_refinement_reg, no) if no else []
        return pos_b, neg_b, v_b, o_b

    def __call__(self, score, vertical_pred, side_refinement,
                 positive, negative, vertical_reg, side_refinement_reg):
        _, c2, H, W = score.shape
        _, kk, _, _ = side_refinement.shape
        hw = H * W

        pos_b, neg_b, v_b, o_b = self._sample(
            positive, negative, vertical_reg, side_refinement_reg)
        self.last_sample = (pos_b, neg_b, v_b, o_b)

        if len(pos_b) == 0 or len(neg_b) == 0:
            warnings.warn("Negative batch size is {0} and positive batch size "
                          "is {1}!".format(len(neg_b), len(pos_b)),
                          RuntimeWarning)
        if len(v_b) == 0:
            warnings.warn("Nv is ZERO!", RuntimeWarning)
        if len(o_b) == 0:
            warnings.warn("No is ZERO!", RuntimeWarning)

        n = self._n_lane

        # ---- pack everything into ONE int index array + ONE float meta array
        # Padded slots: index 0, mask/targets 0 -> they contribute nothing.
        idx = np.zeros((5 * n,), np.int32)
        meta = np.zeros((8, n), np.float32)

        i = 0
        for (x, y, a) in pos_b:
            sp = y * W + x
            idx[i] = (2 * a) * hw + sp
            idx[n + i] = (2 * a + 1) * hw + sp
            meta[0, i] = 1.0          # label = 1
            meta[1, i] = 1.0          # mask
            i += 1
        for (x, y, a) in neg_b:
            sp = y * W + x
            idx[i] = (2 * a) * hw + sp
            idx[n + i] = (2 * a + 1) * hw + sp
            meta[0, i] = 0.0          # label = 0
            meta[1, i] = 1.0          # mask
            i += 1

        for j, (x, y, a, t0, t1) in enumerate(v_b):
            sp = y * W + x
            idx[2 * n + j] = (2 * a) * hw + sp
            idx[3 * n + j] = (2 * a + 1) * hw + sp
            meta[2, j] = t0
            meta[3, j] = t1
            meta[4, j] = 1.0          # mask

        for j, (x, y, a, t0) in enumerate(o_b):
            sp = y * W + x
            idx[4 * n + j] = a * hw + sp
            meta[5, j] = t0
            meta[6, j] = 1.0          # mask

        # per-call normalizers are DATA (SMEM), not compile-time constants
        scales = np.zeros((8,), np.float32)
        scales[0] = (1.0 / float(self.Ns)) if (len(pos_b) and len(neg_b)) else 0.0
        scales[1] = (1.0 / float(len(v_b))) if len(v_b) else 0.0
        scales[2] = (1.0 / float(len(o_b))) if len(o_b) else 0.0
        scales[3] = self.lambda1
        scales[4] = self.lambda2

        fn = _build_ctpn_loss_fn(int(c2), int(kk), int(H), int(W), n)
        out = fn(jnp.asarray(idx), jnp.asarray(scales), jnp.asarray(meta),
                 jnp.asarray(score), jnp.asarray(vertical_pred),
                 jnp.asarray(side_refinement))
        return out[0, 0], out[0, 1], out[0, 2], out[0, 3]


# ----------------------------------------------------------------------------
# Pure numpy reference (mirrors the PyTorch forward) for verification
# ----------------------------------------------------------------------------
def _reference_loss(score, vert, side, pos_b, neg_b, v_b, o_b,
                    Ns, lambda1, lambda2):
    score = np.asarray(score, np.float64)
    vert = np.asarray(vert, np.float64)
    side = np.asarray(side, np.float64)

    def ce(logits, tgt):
        m = logits.max()
        return (m + np.log(np.exp(logits - m).sum())) - logits[tgt]

    def sl1(d):
        ad = np.abs(d)
        return np.where(ad < 1.0, 0.5 * d * d, ad - 0.5)

    cls_loss = 0.0
    if len(pos_b) and len(neg_b):
        for (x, y, a) in pos_b:
            cls_loss += ce(score[0, 2 * a:2 * a + 2, y, x], 1)
        for (x, y, a) in neg_b:
            cls_loss += ce(score[0, 2 * a:2 * a + 2, y, x], 0)
        cls_loss /= Ns

    v_loss = 0.0
    if len(v_b):
        for (x, y, a, t0, t1) in v_b:
            pred = vert[0, 2 * a:2 * a + 2, y, x]
            v_loss += sl1(pred - np.array([t0, t1])).mean()
        v_loss /= float(len(v_b))

    o_loss = 0.0
    if len(o_b):
        for (x, y, a, t0) in o_b:
            pred = side[0, a, y, x]
            o_loss += sl1(np.array([pred - t0])).mean()
        o_loss /= float(len(o_b))

    total = cls_loss + lambda1 * v_loss + lambda2 * o_loss
    return total, cls_loss, v_loss, o_loss


# ----------------------------------------------------------------------------
# Demo / self-check
# ----------------------------------------------------------------------------
if __name__ == "__main__":
    key = jax.random.PRNGKey(0)
    k1, k2, k3 = jax.random.split(key, 3)

    B, K, H, W = 1, 4, 16, 16
    score = jax.random.normal(k1, (B, 2 * K, H, W), jnp.float32)
    vertical_pred = jax.random.normal(k2, (B, 2 * K, H, W), jnp.float32)
    side_refinement = jax.random.normal(k3, (B, K, H, W), jnp.float32)

    pyrng = random.Random(0)
    positive = [(pyrng.randrange(W), pyrng.randrange(H), pyrng.randrange(K))
                for _ in range(10)]
    negative = [(pyrng.randrange(W), pyrng.randrange(H), pyrng.randrange(K))
                for _ in range(10)]
    vertical_reg = [(pyrng.randrange(W), pyrng.randrange(H), pyrng.randrange(K),
                     pyrng.uniform(-2.0, 2.0), pyrng.uniform(-2.0, 2.0))
                    for _ in range(10)]
    side_refinement_reg = [(pyrng.randrange(W), pyrng.randrange(H),
                            pyrng.randrange(K), pyrng.uniform(-2.0, 2.0))
                           for _ in range(6)]

    Ns, Nv, No, ratio = 8, 8, 8, 0.5
    loss_mod = CTPNLossPallas(Ns=Ns, Nv=Nv, No=No, ratio=ratio,
                              lambda1=1.0, lambda2=1.0, sample_seed=0)

    total, cls_l, v_l, o_l = loss_mod(score, vertical_pred, side_refinement,
                                      positive, negative, vertical_reg,
                                      side_refinement_reg)
    jax.block_until_ready(total)

    # reference computed from the exact batches the module sampled
    pos_b, neg_b, v_b, o_b = loss_mod.last_sample
    ref = _reference_loss(np.asarray(score), np.asarray(vertical_pred),
                          np.asarray(side_refinement),
                          pos_b, neg_b, v_b, o_b, Ns, 1.0, 1.0)

    got = np.array([float(total), float(cls_l), float(v_l), float(o_l)])
    want = np.array(ref, dtype=np.float64)
    assert np.allclose(got, want, rtol=1e-3, atol=1e-3), (got, want)

    print("KERNEL_OK")
</pallas_src>

<mosaic_0001>
module attributes {stable_mosaic.version = 11 : i64} {
  func.func @_ctpn_loss_kernel(%arg0: memref<8xf32, #tpu.memory_space<smem>>, %arg1: memref<8x128xf32, #tpu.memory_space<vmem>>, %arg2: memref<8x128xf32, #tpu.memory_space<vmem>>, %arg3: memref<1x4xf32, #tpu.memory_space<vmem>>) attributes {dimension_semantics = [], scalar_prefetch = 0 : i64, scratch_operands = 0 : i64, tpu.core_type = #tpu.core_type<tc>} {
    %c0 = arith.constant 0 : index
    %c0_0 = arith.constant 0 : index
    %0 = vector.load %arg2[%c0, %c0_0] : memref<8x128xf32, #tpu.memory_space<vmem>>, vector<8x128xf32>
    %c0_1 = arith.constant 0 : index
    %c0_2 = arith.constant 0 : index
    %1 = vector.load %arg1[%c0_1, %c0_2] : memref<8x128xf32, #tpu.memory_space<vmem>>, vector<8x128xf32>
    %2 = vector.extract_strided_slice %0 {offsets = [0, 0], sizes = [1, 128], strides = [1, 1]} : vector<8x128xf32> to vector<1x128xf32>
    %3 = vector.extract_strided_slice %0 {offsets = [1, 0], sizes = [1, 128], strides = [1, 1]} : vector<8x128xf32> to vector<1x128xf32>
    %4 = vector.extract_strided_slice %0 {offsets = [2, 0], sizes = [1, 128], strides = [1, 1]} : vector<8x128xf32> to vector<1x128xf32>
    %5 = vector.extract_strided_slice %0 {offsets = [3, 0], sizes = [1, 128], strides = [1, 1]} : vector<8x128xf32> to vector<1x128xf32>
    %6 = vector.extract_strided_slice %0 {offsets = [4, 0], sizes = [1, 128], strides = [1, 1]} : vector<8x128xf32> to vector<1x128xf32>
    %7 = vector.extract_strided_slice %1 {offsets = [0, 0], sizes = [1, 128], strides = [1, 1]} : vector<8x128xf32> to vector<1x128xf32>
    %8 = vector.extract_strided_slice %1 {offsets = [1, 0], sizes = [1, 128], strides = [1, 1]} : vector<8x128xf32> to vector<1x128xf32>
    %9 = vector.extract_strided_slice %1 {offsets = [2, 0], sizes = [1, 128], strides = [1, 1]} : vector<8x128xf32> to vector<1x128xf32>
    %10 = vector.extract_strided_slice %1 {offsets = [3, 0], sizes = [1, 128], strides = [1, 1]} : vector<8x128xf32> to vector<1x128xf32>
    %11 = vector.extract_strided_slice %1 {offsets = [4, 0], sizes = [1, 128], strides = [1, 1]} : vector<8x128xf32> to vector<1x128xf32>
    %12 = vector.extract_strided_slice %1 {offsets = [5, 0], sizes = [1, 128], strides = [1, 1]} : vector<8x128xf32> to vector<1x128xf32>
    %13 = vector.extract_strided_slice %1 {offsets = [6, 0], sizes = [1, 128], strides = [1, 1]} : vector<8x128xf32> to vector<1x128xf32>
    %cst = arith.constant 5.000000e-01 : f32
    %14 = vector.broadcast %cst : f32 to vector<1x128xf32>
    %15 = arith.cmpf ogt, %7, %14 : vector<1x128xf32>
    %16 = arith.subf %2, %3 : vector<1x128xf32>
    %17 = arith.subf %3, %2 : vector<1x128xf32>
    %18 = arith.select %15, %16, %17 : vector<1x128xi1>, vector<1x128xf32>
    %cst_3 = arith.constant 0.000000e+00 : f32
    %19 = vector.broadcast %cst_3 : f32 to vector<1x128xf32>
    %20 = arith.maximumf %18, %19 : vector<1x128xf32>
    %21 = math.absf %18 : vector<1x128xf32>
    %cst_4 = arith.constant 0.000000e+00 : f32
    %22 = vector.broadcast %cst_4 : f32 to vector<1x128xf32>
    %23 = arith.subf %22, %21 : vector<1x128xf32>
    %24 = math.exp %23 : vector<1x128xf32>
    %cst_5 = arith.constant 1.000000e+00 : f32
    %25 = vector.broadcast %cst_5 : f32 to vector<1x128xf32>
    %26 = arith.addf %25, %24 : vector<1x128xf32>
    %27 = math.log %26 : vector<1x128xf32>
    %28 = arith.addf %20, %27 : vector<1x128xf32>
    %29 = arith.mulf %28, %8 : vector<1x128xf32>
    %30 = vector.shape_cast %29 : vector<1x128xf32> to vector<1x1x128xf32>
    %cst_6 = arith.constant dense<0.000000e+00> : vector<1xf32>
    %31 = vector.multi_reduction <add>, %30, %cst_6 [1, 2] : vector<1x1x128xf32> to vector<1xf32>
    %32 = vector.shape_cast %31 : vector<1xf32> to vector<1x1x1xf32>
    %33 = vector.extract %32[0, 0, 0] : f32 from vector<1x1x1xf32>
    %34 = vector.broadcast %33 : f32 to vector<1x1xf32>
    %c0_7 = arith.constant 0 : index
    %35 = memref.load %arg0[%c0_7] : memref<8xf32, #tpu.memory_space<smem>>
    %36 = vector.broadcast %35 : f32 to vector<1x1xf32>
    %37 = arith.mulf %34, %36 : vector<1x1xf32>
    %38 = arith.subf %4, %9 : vector<1x128xf32>
    %39 = math.absf %38 : vector<1x128xf32>
    %cst_8 = arith.constant 1.000000e+00 : f32
    %40 = vector.broadcast %cst_8 : f32 to vector<1x128xf32>
    %41 = arith.cmpf olt, %39, %40 : vector<1x128xf32>
    %cst_9 = arith.constant 5.000000e-01 : f32
    %42 = vector.broadcast %cst_9 : f32 to vector<1x128xf32>
    %43 = arith.mulf %42, %38 : vector<1x128xf32>
    %44 = arith.mulf %43, %38 : vector<1x128xf32>
    %cst_10 = arith.constant 5.000000e-01 : f32
    %45 = vector.broadcast %cst_10 : f32 to vector<1x128xf32>
    %46 = arith.subf %39, %45 : vector<1x128xf32>
    %47 = arith.select %41, %44, %46 : vector<1x128xi1>, vector<1x128xf32>
    %48 = arith.subf %5, %10 : vector<1x128xf32>
    %49 = math.absf %48 : vector<1x128xf32>
    %cst_11 = arith.constant 1.000000e+00 : f32
    %50 = vector.broadcast %cst_11 : f32 to vector<1x128xf32>
    %51 = arith.cmpf olt, %49, %50 : vector<1x128xf32>
    %cst_12 = arith.constant 5.000000e-01 : f32
    %52 = vector.broadcast %cst_12 : f32 to vector<1x128xf32>
    %53 = arith.mulf %52, %48 : vector<1x128xf32>
    %54 = arith.mulf %53, %48 : vector<1x128xf32>
    %cst_13 = arith.constant 5.000000e-01 : f32
    %55 = vector.broadcast %cst_13 : f32 to vector<1x128xf32>
    %56 = arith.subf %49, %55 : vector<1x128xf32>
    %57 = arith.select %51, %54, %56 : vector<1x128xi1>, vector<1x128xf32>
    %58 = arith.addf %47, %57 : vector<1x128xf32>
    %cst_14 = arith.constant 5.000000e-01 : f32
    %59 = vector.broadcast %cst_14 : f32 to vector<1x128xf32>
    %60 = arith.mulf %59, %58 : vector<1x128xf32>
    %61 = arith.mulf %60, %11 : vector<1x128xf32>
    %62 = vector.shape_cast %61 : vector<1x128xf32> to vector<1x1x128xf32>
    %cst_15 = arith.constant dense<0.000000e+00> : vector<1xf32>
    %63 = vector.multi_reduction <add>, %62, %cst_15 [1, 2] : vector<1x1x128xf32> to vector<1xf32>
    %64 = vector.shape_cast %63 : vector<1xf32> to vector<1x1x1xf32>
    %65 = vector.extract %64[0, 0, 0] : f32 from vector<1x1x1xf32>
    %66 = vector.broadcast %65 : f32 to vector<1x1xf32>
    %c1 = arith.constant 1 : index
    %67 = memref.load %arg0[%c1] : memref<8xf32, #tpu.memory_space<smem>>
    %68 = vector.broadcast %67 : f32 to vector<1x1xf32>
    %69 = arith.mulf %66, %68 : vector<1x1xf32>
    %70 = arith.subf %6, %12 : vector<1x128xf32>
    %71 = math.absf %70 : vector<1x128xf32>
    %cst_16 = arith.constant 1.000000e+00 : f32
    %72 = vector.broadcast %cst_16 : f32 to vector<1x128xf32>
    %73 = arith.cmpf olt, %71, %72 : vector<1x128xf32>
    %cst_17 = arith.constant 5.000000e-01 : f32
    %74 = vector.broadcast %cst_17 : f32 to vector<1x128xf32>
    %75 = arith.mulf %74, %70 : vector<1x128xf32>
    %76 = arith.mulf %75, %70 : vector<1x128xf32>
    %cst_18 = arith.constant 5.000000e-01 : f32
    %77 = vector.broadcast %cst_18 : f32 to vector<1x128xf32>
    %78 = arith.subf %71, %77 : vector<1x128xf32>
    %79 = arith.select %73, %76, %78 : vector<1x128xi1>, vector<1x128xf32>
    %80 = arith.mulf %79, %13 : vector<1x128xf32>
    %81 = vector.shape_cast %80 : vector<1x128xf32> to vector<1x1x128xf32>
    %cst_19 = arith.constant dense<0.000000e+00> : vector<1xf32>
    %82 = vector.multi_reduction <add>, %81, %cst_19 [1, 2] : vector<1x1x128xf32> to vector<1xf32>
    %83 = vector.shape_cast %82 : vector<1xf32> to vector<1x1x1xf32>
    %84 = vector.extract %83[0, 0, 0] : f32 from vector<1x1x1xf32>
    %85 = vector.broadcast %84 : f32 to vector<1x1xf32>
    %c2 = arith.constant 2 : index
    %86 = memref.load %arg0[%c2] : memref<8xf32, #tpu.memory_space<smem>>
    %87 = vector.broadcast %86 : f32 to vector<1x1xf32>
    %88 = arith.mulf %85, %87 : vector<1x1xf32>
    %c3 = arith.constant 3 : index
    %89 = memref.load %arg0[%c3] : memref<8xf32, #tpu.memory_space<smem>>
    %90 = vector.broadcast %89 : f32 to vector<1x1xf32>
    %91 = arith.mulf %90, %69 : vector<1x1xf32>
    %92 = arith.addf %37, %91 : vector<1x1xf32>
    %c4 = arith.constant 4 : index
    %93 = memref.load %arg0[%c4] : memref<8xf32, #tpu.memory_space<smem>>
    %94 = vector.broadcast %93 : f32 to vector<1x1xf32>
    %95 = arith.mulf %94, %88 : vector<1x1xf32>
    %96 = arith.addf %92, %95 : vector<1x1xf32>
    %97 = tpu.iota {dimensions = array<i32: 1>} : vector<1x4xi32>
    %cst_20 = arith.constant 0.000000e+00 : f32
    %98 = vector.broadcast %cst_20 : f32 to vector<1x4xf32>
    %c0_i32 = arith.constant 0 : i32
    %99 = vector.broadcast %c0_i32 : i32 to vector<1x4xi32>
    %100 = arith.cmpi eq, %97, %99 : vector<1x4xi32>
    %101 = vector.shape_cast %96 : vector<1x1xf32> to vector<1x1xf32>
    %102 = vector.broadcast %101 : vector<1x1xf32> to vector<1x4xf32>
    %103 = arith.select %100, %102, %98 : vector<1x4xi1>, vector<1x4xf32>
    %c1_i32 = arith.constant 1 : i32
    %104 = vector.broadcast %c1_i32 : i32 to vector<1x4xi32>
    %105 = arith.cmpi eq, %97, %104 : vector<1x4xi32>
    %106 = vector.shape_cast %37 : vector<1x1xf32> to vector<1x1xf32>
    %107 = vector.broadcast %106 : vector<1x1xf32> to vector<1x4xf32>
    %108 = arith.select %105, %107, %103 : vector<1x4xi1>, vector<1x4xf32>
    %c2_i32 = arith.constant 2 : i32
    %109 = vector.broadcast %c2_i32 : i32 to vector<1x4xi32>
    %110 = arith.cmpi eq, %97, %109 : vector<1x4xi32>
    %111 = vector.shape_cast %69 : vector<1x1xf32> to vector<1x1xf32>
    %112 = vector.broadcast %111 : vector<1x1xf32> to vector<1x4xf32>
    %113 = arith.select %110, %112, %108 : vector<1x4xi1>, vector<1x4xf32>
    %c3_i32 = arith.constant 3 : i32
    %114 = vector.broadcast %c3_i32 : i32 to vector<1x4xi32>
    %115 = arith.cmpi eq, %97, %114 : vector<1x4xi32>
    %116 = vector.shape_cast %88 : vector<1x1xf32> to vector<1x1xf32>
    %117 = vector.broadcast %116 : vector<1x1xf32> to vector<1x4xf32>
    %118 = arith.select %115, %117, %113 : vector<1x4xi1>, vector<1x4xf32>
    %c0_21 = arith.constant 0 : index
    %c0_22 = arith.constant 0 : index
    %119 = vector.load %arg3[%c0_21, %c0_22] : memref<1x4xf32, #tpu.memory_space<vmem>>, vector<1x4xf32>
    tpu.vector_store %arg3[%c0_21, %c0_22], %118 {strides = array<i32>} : memref<1x4xf32, #tpu.memory_space<vmem>>, vector<1x4xf32>,
    return
  }
}

</mosaic_0001>

<llo_original>
// kernel: squeeze.5
$region0: #{squeeze.5}
  %s0 = inlined_call_operand.hbm [shape: f32[1,4,16,16], index: 0, kind: input, shape index: {}]
  %s1 = inlined_call_operand.vmem [shape: f32[1024], index: 1, kind: output, shape index: {}]
  $region1: #{squeeze.5} parent=0
    #allocation0 [shape = 'u8[32768]{0}', space=vmem, size = 0x8000, scoped, tag = 'operand span for operand 0']
    #allocation1 [shape = 's32[1]{0}', space=sflag, size = 0x4, scoped, tag = 'scoped memory for squeeze.5']
    %2 = vsyncpa [#allocation1], 0
    %s4 = ssub.s32 1024, 1024
    %5 = vsyncadd [#allocation1], %s4
    %s7 = sshll.u32 [#allocation0], 4
    %s8 = int_to_ptr.vmem [resolvable:$true] %s7
    %10 = dma.hbm_to_vmem [thread:$0]  %s0, 1024, %s8, [#allocation1]
    %11 = dma.done [#allocation1], 1024
    %v12 = vld [vmem:[#allocation0] ss:$8 sm:$0xf]
    %v13 = vld [vmem:[#allocation0] ss:$8 sm:$0xf0]
    %vm14 = vcmask 1047556
    %v15 = vsel %vm14, %v13, %v12
    %vm16 = vcmask 130048
    %17 = vst.msk [vmem:[%s1] sm:$0xff] %vm16, %v15
    %s18 = scalar_lea.vmem [#allocation0], 7
    %v19 = vld [vmem:[%s18] ss:$8 sm:$0xf]
    %s20 = scalar_lea.vmem [#allocation0], 7
    %v21 = vld [vmem:[%s20] ss:$8 sm:$0xf0]
    %vm22 = vcmask 1047556
    %v23 = vsel %vm22, %v21, %v19
    %24 = vrot.lane.b32.xlu0 %v23, 112
    %v25 = vpop.permute.xlu0 %24
    %vm26 = vcmask 1048448
    %27 = vst.msk [vmem:[%s1] sm:$0xff] %vm26, %v25
    %s28 = scalar_lea.vmem [#allocation0], 6
    %v29 = vld [vmem:[%s28] ss:$8 sm:$0xf]
    %s30 = scalar_lea.vmem [#allocation0], 6
    %v31 = vld [vmem:[%s30] ss:$8 sm:$0xf0]
    %vm32 = vcmask 1047556
    %v33 = vsel %vm32, %v31, %v29
    %34 = vrot.lane.b32.xlu0 %v33, 96
    %v35 = vpop.permute.xlu0 %34
    %vm36 = vcmask 917248
    %37 = vst.msk [vmem:[%s1] sm:$0xff] %vm36, %v35
    %s38 = scalar_lea.vmem [#allocation0], 5
    %v39 = vld [vmem:[%s38] ss:$8 sm:$0xf]
    %s40 = scalar_lea.vmem [#allocation0], 5
    %v41 = vld [vmem:[%s40] ss:$8 sm:$0xf0]
    %vm42 = vcmask 1047556
    %v43 = vsel %vm42, %v41, %v39
    %44 = vrot.lane.b32.xlu0 %v43, 80
    %v45 = vpop.permute.xlu0 %44
    %vm46 = vcmask 786048
    %47 = vst.msk [vmem:[%s1] sm:$0xff] %vm46, %v45
    %s48 = scalar_lea.vmem [#allocation0], 4
    %v49 = vld [vmem:[%s48] ss:$8 sm:$0xf]
    %s50 = scalar_lea.vmem [#allocation0], 4
    %v51 = vld [vmem:[%s50] ss:$8 sm:$0xf0]
    %vm52 = vcmask 1047556
    %v53 = vsel %vm52, %v51, %v49
    %54 = vrot.lane.b32.xlu0 %v53, 64
    %v55 = vpop.permute.xlu0 %54
    %vm56 = vcmask 654848
    %57 = vst.msk [vmem:[%s1] sm:$0xff] %vm56, %v55
    %s58 = scalar_lea.vmem [#allocation0], 3
    %v59 = vld [vmem:[%s58] ss:$8 sm:$0xf]
    %s60 = scalar_lea.vmem [#allocation0], 3
    %v61 = vld [vmem:[%s60] ss:$8 sm:$0xf0]
    %vm62 = vcmask 1047556
    %v63 = vsel %vm62, %v61, %v59
    %64 = vrot.lane.b32.xlu0 %v63, 48
    %v65 = vpop.permute.xlu0 %64
    %vm66 = vcmask 523648
    %67 = vst.msk [vmem:[%s1] sm:$0xff] %vm66, %v65
    %s68 = scalar_lea.vmem [#allocation0], 2
    %v69 = vld [vmem:[%s68] ss:$8 sm:$0xf]
    %s70 = scalar_lea.vmem [#allocation0], 2
    %v71 = vld [vmem:[%s70] ss:$8 sm:$0xf0]
    %vm72 = vcmask 1047556
    %v73 = vsel %vm72, %v71, %v69
    %74 = vrot.lane.b32.xlu0 %v73, 32
    %v75 = vpop.permute.xlu0 %74
    %vm76 = vcmask 392448
    %77 = vst.msk [vmem:[%s1] sm:$0xff] %vm76, %v75
    %s78 = scalar_lea.vmem [#allocation0], 1
    %v79 = vld [vmem:[%s78] ss:$8 sm:$0xf]
    %s80 = scalar_lea.vmem [#allocation0], 1
    %v81 = vld [vmem:[%s80] ss:$8 sm:$0xf0]
    %vm82 = vcmask 1047556
    %v83 = vsel %vm82, %v81, %v79
    %84 = vrot.lane.b32.xlu0 %v83, 16
    %v85 = vpop.permute.xlu0 %84
    %vm86 = vcmask 261248
    %87 = vst.msk [vmem:[%s1] sm:$0xff] %vm86, %v85
    %88 = vsyncpa [#allocation1], 1

// kernel: squeeze.4
$region0: #{squeeze.4}
  %s0 = inlined_call_operand.vmem [shape: f32[1,8,16,16], index: 0, kind: input, shape index: {}]
  %s1 = inlined_call_operand.vmem [shape: f32[2048], index: 1, kind: output, shape index: {}]
  %v2 = vld [vmem:[%s0] ss:$8 sm:$0xf]
  %v3 = vld [vmem:[%s0] ss:$8 sm:$0xf0]
  %vm4 = vcmask 1047556
  %v5 = vsel %vm4, %v3, %v2
  %vm6 = vcmask 130048
  %7 = vst.msk [vmem:[%s1] sm:$0xff] %vm6, %v5
  %s8 = scalar_lea.vmem %s0, 64
  %v9 = vld [vmem:[%s8] ss:$8 sm:$0xf]
  %s10 = scalar_lea.vmem %s0, 64
  %v11 = vld [vmem:[%s10] ss:$8 sm:$0xf0]
  %vm12 = vcmask 1047556
  %v13 = vsel %vm12, %v11, %v9
  %vm14 = vcmask 130048
  %s15 = scalar_lea.vmem %s1, 8
  %16 = vst.msk [vmem:[%s15] sm:$0xff] %vm14, %v13
  %s17 = scalar_lea.vmem %s0, 7
  %v18 = vld [vmem:[%s17] ss:$8 sm:$0xf]
  %s19 = scalar_lea.vmem %s0, 7
  %v20 = vld [vmem:[%s19] ss:$8 sm:$0xf0]
  %vm21 = vcmask 1047556
  %v22 = vsel %vm21, %v20, %v18
  %23 = vrot.lane.b32.xlu0 %v22, 112
  %v24 = vpop.permute.xlu0 %23
  %vm25 = vcmask 1048448
  %26 = vst.msk [vmem:[%s1] sm:$0xff] %vm25, %v24
  %s27 = scalar_lea.vmem %s0, 71
  %v28 = vld [vmem:[%s27] ss:$8 sm:$0xf]
  %s29 = scalar_lea.vmem %s0, 71
  %v30 = vld [vmem:[%s29] ss:$8 sm:$0xf0]
  %vm31 = vcmask 1047556
  %v32 = vsel %vm31, %v30, %v28
  %33 = vrot.lane.b32.xlu0 %v32, 112
  %v34 = vpop.permute.xlu0 %33
  %vm35 = vcmask 1048448
  %s36 = scalar_lea.vmem %s1, 8
  %37 = vst.msk [vmem:[%s36] sm:$0xff] %vm35, %v34
  %s38 = scalar_lea.vmem %s0, 6
  %v39 = vld [vmem:[%s38] ss:$8 sm:$0xf]
  %s40 = scalar_lea.vmem %s0, 6
  %v41 = vld [vmem:[%s40] ss:$8 sm:$0xf0]
  %vm42 = vcmask 1047556
  %v43 = vsel %vm42, %v41, %v39
  %44 = vrot.lane.b32.xlu0 %v43, 96
  %v45 = vpop.permute.xlu0 %44
  %vm46 = vcmask 917248
  %47 = vst.msk [vmem:[%s1] sm:$0xff] %vm46, %v45
  %s48 = scalar_lea.vmem %s0, 70
  %v49 = vld [vmem:[%s48] ss:$8 sm:$0xf]
  %s50 = scalar_lea.vmem %s0, 70
  %v51 = vld [vmem:[%s50] ss:$8 sm:$0xf0]
  %vm52 = vcmask 1047556
  %v53 = vsel %vm52, %v51, %v49
  %54 = vrot.lane.b32.xlu0 %v53, 96
  %v55 = vpop.permute.xlu0 %54
  %vm56 = vcmask 917248
  %s57 = scalar_lea.vmem %s1, 8
  %58 = vst.msk [vmem:[%s57] sm:$0xff] %vm56, %v55
  %s59 = scalar_lea.vmem %s0, 5
  %v60 = vld [vmem:[%s59] ss:$8 sm:$0xf]
  %s61 = scalar_lea.vmem %s0, 5
  %v62 = vld [vmem:[%s61] ss:$8 sm:$0xf0]
  %vm63 = vcmask 1047556
  %v64 = vsel %vm63, %v62, %v60
  %65 = vrot.lane.b32.xlu0 %v64, 80
  %v66 = vpop.permute.xlu0 %65
  %vm67 = vcmask 786048
  %68 = vst.msk [vmem:[%s1] sm:$0xff] %vm67, %v66
  %s69 = scalar_lea.vmem %s0, 69
  %v70 = vld [vmem:[%s69] ss:$8 sm:$0xf]
  %s71 = scalar_lea.vmem %s0, 69
  %v72 = vld [vmem:[%s71] ss:$8 sm:$0xf0]
  %vm73 = vcmask 1047556
  %v74 = vsel %vm73, %v72, %v70
  %75 = vrot.lane.b32.xlu0 %v74, 80
  %v76 = vpop.permute.xlu0 %75
  %vm77 = vcmask 786048
  %s78 = scalar_lea.vmem %s1, 8
  %79 = vst.msk [vmem:[%s78] sm:$0xff] %vm77, %v76
  %s80 = scalar_lea.vmem %s0, 4
  %v81 = vld [vmem:[%s80] ss:$8 sm:$0xf]
  %s82 = scalar_lea.vmem %s0, 4
  %v83 = vld [vmem:[%s82] ss:$8 sm:$0xf0]
  %vm84 = vcmask 1047556
  %v85 = vsel %vm84, %v83, %v81
  %86 = vrot.lane.b32.xlu0 %v85, 64
  %v87 = vpop.permute.xlu0 %86
  %vm88 = vcmask 654848
  %89 = vst.msk [vmem:[%s1] sm:$0xff] %vm88, %v87
  %s90 = scalar_lea.vmem %s0, 68
  %v91 = vld [vmem:[%s90] ss:$8 sm:$0xf]
  %s92 = scalar_lea.vmem %s0, 68
  %v93 = vld [vmem:[%s92] ss:$8 sm:$0xf0]
  %vm94 = vcmask 1047556
  %v95 = vsel %vm94, %v93, %v91
  %96 = vrot.lane.b32.xlu0 %v95, 64
  %v97 = vpop.permute.xlu0 %96
  %vm98 = vcmask 654848
  %s99 = scalar_lea.vmem %s1, 8
  %100 = vst.msk [vmem:[%s99] sm:$0xff] %vm98, %v97
  %s101 = scalar_lea.vmem %s0, 3
  %v102 = vld [vmem:[%s101] ss:$8 sm:$0xf]
  %s103 = scalar_lea.vmem %s0, 3
  %v104 = vld [vmem:[%s103] ss:$8 sm:$0xf0]
  %vm105 = vcmask 1047556
  %v106 = vsel %vm105, %v104, %v102
  %107 = vrot.lane.b32.xlu0 %v106, 48
  %v108 = vpop.permute.xlu0 %107
  %vm109 = vcmask 523648
  %110 = vst.msk [vmem:[%s1] sm:$0xff] %vm109, %v108
  %s111 = scalar_lea.vmem %s0, 67
  %v112 = vld [vmem:[%s111] ss:$8 sm:$0xf]
  %s113 = scalar_lea.vmem %s0, 67
  %v114 = vld [vmem:[%s113] ss:$8 sm:$0xf0]
  %vm115 = vcmask 1047556
  %v116 = vsel %vm115, %v114, %v112
  %117 = vrot.lane.b32.xlu0 %v116, 48
  %v118 = vpop.permute.xlu0 %117
  %vm119 = vcmask 523648
  %s120 = scalar_lea.vmem %s1, 8
  %121 = vst.msk [vmem:[%s120] sm:$0xff] %vm119, %v118
  %s122 = scalar_lea.vmem %s0, 2
  %v123 = vld [vmem:[%s122] ss:$8 sm:$0xf]
  %s124 = scalar_lea.vmem %s0, 2
  %v125 = vld [vmem:[%s124] ss:$8 sm:$0xf0]
  %vm126 = vcmask 1047556
  %v127 = vsel %vm126, %v125, %v123
  %128 = vrot.lane.b32.xlu0 %v127, 32
  %v129 = vpop.permute.xlu0 %128
  %vm130 = vcmask 392448
  %131 = vst.msk [vmem:[%s1] sm:$0xff] %vm130, %v129
  %s132 = scalar_lea.vmem %s0, 66
  %v133 = vld [vmem:[%s132] ss:$8 sm:$0xf]
  %s134 = scalar_lea.vmem %s0, 66
  %v135 = vld [vmem:[%s134] ss:$8 sm:$0xf0]
  %vm136 = vcmask 1047556
  %v137 = vsel %vm136, %v135, %v133
  %138 = vrot.lane.b32.xlu0 %v137, 32
  %v139 = vpop.permute.xlu0 %138
  %vm140 = vcmask 392448
  %s141 = scalar_lea.vmem %s1, 8
  %142 = vst.msk [vmem:[%s141] sm:$0xff] %vm140, %v139
  %s143 = scalar_lea.vmem %s0, 1
  %v144 = vld [vmem:[%s143] ss:$8 sm:$0xf]
  %s145 = scalar_lea.vmem %s0, 1
  %v146 = vld [vmem:[%s145] ss:$8 sm:$0xf0]
  %vm147 = vcmask 1047556
  %v148 = vsel %vm147, %v146, %v144
  %149 = vrot.lane.b32.xlu0 %v148, 16
  %v150 = vpop.permute.xlu0 %149
  %vm151 = vcmask 261248
  %152 = vst.msk [vmem:[%s1] sm:$0xff] %vm151, %v150
  %s153 = scalar_lea.vmem %s0, 65
  %v154 = vld [vmem:[%s153] ss:$8 sm:$0xf]
  %s155 = scalar_lea.vmem %s0, 65
  %v156 = vld [vmem:[%s155] ss:$8 sm:$0xf0]
  %vm157 = vcmask 1047556
  %v158 = vsel %vm157, %v156, %v154
  %159 = vrot.lane.b32.xlu0 %v158, 16
  %v160 = vpop.permute.xlu0 %159
  %vm161 = vcmask 261248
  %s162 = scalar_lea.vmem %s1, 8
  %163 = vst.msk [vmem:[%s162] sm:$0xff] %vm161, %v160

// kernel: fn.1
$region0: #{fn.1}
  #allocation0 [shape = 'u32[]', space=smem, size = 0x4, offset = 0x4, fixed_abs, tag = 'smem constant byte address 0x4 - core index']
  #allocation1 [shape = 'u32[144,128]{1,0:T(1,128)}', space=vmem, size = 0x12000, scoped, tag = 'internal scratch']
  %s0 = inlined_call_operand.vmem [shape: f32[8], index: 0, kind: input, shape index: {}]
  %s1 = inlined_call_operand.vmem [shape: f32[8,128], index: 1, kind: input, shape index: {}]
  %s2 = inlined_call_operand.vmem [shape: f32[8,128], index: 2, kind: input, shape index: {}]
  %s3 = inlined_call_operand.hbm [shape: f32[1,4], index: 3, kind: output, shape index: {}]
  %s4 = sld [smem:[#allocation0]]
  $region26: #{fn.1} parent=0
    _
  %s6 = ssub.s32 1, %s4
  %s7 = scalar_select 0, %s6, %s4
  $region1: #{fn.1} parent=0
    #allocation2 [shape = 'u8[512]{0}', space=smem, size = 0x200, scoped, tag = 'input window, operand 0, single buffered']
    #allocation3 [shape = 's32[1]{0}', space=sflag, size = 0x4, scoped, tag = 'scoped memory for fn.1']
    #allocation4 [shape = 's32[1]{0}', space=sflag, size = 0x4, scoped, tag = 'scoped memory for fn.1']
    #allocation5 [shape = 'u8[512]{0}', space=vmem, size = 0x400, scoped, tag = 'output window, operand 0, single buffered']
    %8 = vsyncpa [#allocation4], 0
    %9 = vsyncpa [#allocation3], 0
    // Predicated region
    $region2: #{fn.1} parent=1 // pred_check
      _
    $region3: #{fn.1} parent=1 // pred_check_branch
      %11 = sbr.rel (0) target = $region5
    $region4: #{fn.1} parent=1 // pred_region
      %s13 = ssub.s32 16, 16
      %14 = vsyncadd [#allocation4], %s13
      %s16 = sshll.u32 %s0, 4
      %s17 = int_to_ptr.vmem [resolvable:$true] %s16
      %19 = dma.vmem_to_smem %s17, 16, [#allocation2], [#allocation4]
    $region5: #{fn.1} parent=1 // pred_fallthru
      _
    // Predicated region
    $region6: #{fn.1} parent=1 // pred_check
      _
    $region7: #{fn.1} parent=1 // pred_check_branch
      %21 = sbr.rel (0) target = $region9
    $region8: #{fn.1} parent=1 // pred_region
      _
    $region9: #{fn.1} parent=1 // pred_fallthru
      _
    // Predicated region
    $region10: #{fn.1} parent=1 // pred_check
      _
    $region11: #{fn.1} parent=1 // pred_check_branch
      %23 = sbr.rel (0) target = $region13
    $region12: #{fn.1} parent=1 // pred_region
      _
    $region13: #{fn.1} parent=1 // pred_fallthru
      _
    // Predicated region
    $region14: #{fn.1} parent=1 // pred_check
      _
    $region15: #{fn.1} parent=1 // pred_check_branch
      %25 = sbr.rel (0) target = $region17
    $region16: #{fn.1} parent=1 // pred_region
      %26 = dma.done [#allocation4], 16
    $region17: #{fn.1} parent=1 // pred_fallthru
      _
    %27 = sfence
    %v28 = vld [vmem:[%s2] sm:$0xff]
    %v29 = vld [vmem:[%s1] sm:$0xff]
    %vm30 = vcmp.gt.f32.partialorder %v29, 0.5
    %v32 = vrot.slane %v28, 1
    %v34 = vsub.f32 %v28, %v32
    %v35 = vrot.slane %v28, 7
    %v37 = vsub.f32 %v28, %v35
    %v39 = vrot.slane %v37, 1
    %v41 = vsel %vm30, %v34, %v39
    %v42 = vmax.f32 %v41, 0.0
    %v43 = vand.u32 2147483647, %v41
    %v44 = vsub.f32 0.0, %v43
    %v45 = vmul.f32 %v44, 1.442695
    %v46 = vpow.pop %v45
    %v47 = vadd.f32 %v46, 1.0
    %v48 = vlog2.pop %v47
    %v49 = vmul.f32 %v48, 0.6931472
    %v50 = vadd.f32 %v42, %v49
    %v52 = vrot.slane %v29, 1
    %v54 = vmul.f32 %v50, %v52
    %vm55 = vcmask 1040384
    %v56 = vsel %vm55, %v54, 0.0
    %57 = vadd.xlane.f32.xlu0 %v56
    %v58 = vpop.xlane.xlu0 %57
    %v59 = vrot.slane %v58, 4
    %v60 = vadd.f32 %v58, %v59
    %v61 = vrot.slane %v60, 2
    %v62 = vadd.f32 %v60, %v61
    %v63 = vrot.slane %v62, 1
    %v64 = vadd.f32 %v62, %v63
    %s65 = vtos %v64
    %v66 = vstv %s65
    %s67 = sld [smem:[#allocation2]]
    %v68 = vstv %s67
    %v69 = vmul.f32 %v66, %v68
    %v70 = vsub.f32 %v28, %v29
    %v71 = vand.u32 2147483647, %v70
    %vm72 = vcmp.lt.f32.partialorder %v71, 1.0
    %v73 = vmul.f32 %v70, 0.5
    %v74 = vmul.f32 %v73, %v70
    %v75 = vsub.f32 %v71, 0.5
    %v76 = vsel %vm72, %v74, %v75
    %v78 = vrot.slane %v76, 1
    %v80 = vadd.f32 %v76, %v78
    %v81 = vmul.f32 %v80, 0.5
    %v82 = vrot.slane %v29, 2
    %v84 = vmul.f32 %v81, %v82
    %v86 = vrot.slane %v84, 2
    %v88 = vsel %vm55, %v86, 0.0
    %89 = vadd.xlane.f32.xlu0 %v88
    %v90 = vpop.xlane.xlu0 %89
    %v91 = vrot.slane %v90, 4
    %v92 = vadd.f32 %v90, %v91
    %v93 = vrot.slane %v92, 2
    %v94 = vadd.f32 %v92, %v93
    %v95 = vrot.slane %v94, 1
    %v96 = vadd.f32 %v94, %v95
    %s97 = vtos %v96
    %v98 = vstv %s97
    %s99 = sld [smem:[#allocation2 + $0x1]]
    %v100 = vstv %s99
    %v101 = vmul.f32 %v98, %v100
    %v102 = vsub.f32 %v28, %v52
    %v103 = vand.u32 2147483647, %v102
    %vm104 = vcmp.lt.f32.partialorder %v103, 1.0
    %v105 = vmul.f32 %v102, 0.5
    %v106 = vmul.f32 %v105, %v102
    %v107 = vsub.f32 %v103, 0.5
    %v108 = vsel %vm104, %v106, %v107
    %v109 = vmul.f32 %v108, %v82
    %v111 = vrot.slane %v109, 4
    %v113 = vsel %vm55, %v111, 0.0
    %114 = vadd.xlane.f32.xlu0 %v113
    %v115 = vpop.xlane.xlu0 %114
    %v116 = vrot.slane %v115, 4
    %v117 = vadd.f32 %v115, %v116
    %v118 = vrot.slane %v117, 2
    %v119 = vadd.f32 %v117, %v118
    %v120 = vrot.slane %v119, 1
    %v121 = vadd.f32 %v119, %v120
    %s122 = vtos %v121
    %v123 = vstv %s122
    %s124 = sld [smem:[#allocation2 + $0x2]]
    %v125 = vstv %s124
    %v126 = vmul.f32 %v123, %v125
    %s127 = sld [smem:[#allocation2 + $0x3]]
    %v128 = vstv %s127
    %v129 = vmul.f32 %v128, %v101
    %v130 = vadd.f32 %v69, %v129
    %s131 = sld [smem:[#allocation2 + $0x4]]
    %v132 = vstv %s131
    %v133 = vmul.f32 %v132, %v126
    %v134 = vadd.f32 %v130, %v133
    %v135 = vlaneseq
    %v136 = vand.u32 %v135, 127
    %vm137 = vcmp.eq.s32.totalorder %v136, 0
    %v138 = vsel %vm137, %v134, 0.0
    %vm139 = vcmp.eq.s32.totalorder %v136, 1
    %v140 = vsel %vm139, %v69, %v138
    %vm141 = vcmp.eq.s32.totalorder %v136, 2
    %v142 = vsel %vm141, %v101, %v140
    %vm143 = vcmp.eq.s32.totalorder %v136, 3
    %v144 = vsel %vm143, %v126, %v142
    %vm145 = vcmask 24576
    %146 = vst.msk [vmem:[#allocation5] sm:$0x1] %vm145, %v144
    // Predicated region
    $region18: #{fn.1} parent=1 // pred_check
      _
    $region19: #{fn.1} parent=1 // pred_check_branch
      %148 = sbr.rel (0) target = $region21
    $region20: #{fn.1} parent=1 // pred_region
      %s150 = ssub.s32 16, 16
      %151 = vsyncadd [#allocation3], %s150
      %s153 = sshll.u32 [#allocation5], 4
      %s154 = int_to_ptr.vmem [resolvable:$true] %s153
      %156 = dma.vmem_to_hbm [thread:$0]  %s154, 16, %s3, [#allocation3]
    $region21: #{fn.1} parent=1 // pred_fallthru
      _
    // Predicated region
    $region22: #{fn.1} parent=1 // pred_check
      _
    $region23: #{fn.1} parent=1 // pred_check_branch
      %158 = sbr.rel (0) target = $region25
    $region24: #{fn.1} parent=1 // pred_region
      %159 = dma.done [#allocation3], 16
    $region25: #{fn.1} parent=1 // pred_fallthru
      _
    %160 = vsyncpa [#allocation3], 1
    %161 = vsyncpa [#allocation4], 1

</llo_original>
